<compile_context>
chip_gen: v7x
topology: tpu7x:2x2x1
jax: 0.10.0
libtpu: 0.0.40
codegen_flags: <defaults>
</compile_context>

<pallas_src>
import jax
import jax.numpy as jnp
from jax.experimental import pallas as pl
from jax.experimental.pallas import tpu as pltpu

LANES = 128
TARGET_BLOCK_BYTES = 2 << 20   # ~roofline plateau; small enough for many even steps on v7x
MIN_BLOCK_BYTES = 512 << 10    # below this the ~0.35us per-grid-step overhead shows up


def _sin_kernel(x_ref, o_ref):
    # Elementwise sin on the whole VMEM tile (pure streaming; VPU path, no MXU).
    o_ref[...] = jnp.sin(x_ref[...])


def _round_up(n: int, m: int) -> int:
    return -(-n // m) * m


def _pick_tile_rows(rows: int, granule: int, row_bytes: int) -> int:
    """Block rows: ~TARGET_BLOCK_BYTES, >= 8 roughly-equal steps on large inputs."""
    target = max(granule, (TARGET_BLOCK_BYTES // row_bytes) // granule * granule)
    min_rows = max(granule, (MIN_BLOCK_BYTES // row_bytes) // granule * granule)
    # >= 8 roughly equal steps keeps both v7x TensorCores busy ...
    tile = min(target, max(min_rows, _round_up(-(-rows // 8), granule)))
    # ... but never oversplit small inputs: keep >= 2 steps when possible and
    # never exceed the (granule-rounded) array extent.
    tile = min(tile, max(granule, _round_up(-(-rows // 2), granule)))
    return max(granule, min(tile, _round_up(rows, granule)))


def _sin_2d(x2d: jax.Array, tile_rows: int) -> jax.Array:
    rows, lanes = x2d.shape
    itemsize = jnp.dtype(x2d.dtype).itemsize
    # Actual double-buffered working set: 2 pipeline buffers x (in + out) x tile,
    # plus 2x headroom for Mosaic internal scratch.  Computed, not hard-coded,
    # so v7x (64 MiB physical VMEM) stays comfortable while v5e's 16 MiB scoped
    # default is still unblocked.
    working_set = 4 * tile_rows * lanes * itemsize
    vmem_limit = int(min(64 << 20, max(16 << 20, 2 * working_set)))
    return pl.pallas_call(
        _sin_kernel,
        out_shape=jax.ShapeDtypeStruct((rows, lanes), x2d.dtype),
        grid_spec=pltpu.PrefetchScalarGridSpec(
            num_scalar_prefetch=0,
            grid=(pl.cdiv(rows, tile_rows),),
            in_specs=[pl.BlockSpec((tile_rows, lanes), lambda i: (i, 0))],
            out_specs=pl.BlockSpec((tile_rows, lanes), lambda i: (i, 0)),
        ),
        compiler_params=pltpu.CompilerParams(
            dimension_semantics=("parallel",),
            vmem_limit_bytes=vmem_limit,
        ),
    )(x2d)


@jax.jit
def sin_pallas(x: jax.Array) -> jax.Array:
    """Elementwise sin via a Pallas TPU kernel. Works for any shape."""
    orig_shape = x.shape
    if x.size == 0:
        return x
    if not jnp.issubdtype(x.dtype, jnp.floating):
        # torch.sin promotes integer inputs to floating point.
        x = x.astype(jnp.float32)

    dtype = x.dtype
    itemsize = jnp.dtype(dtype).itemsize
    # Native sublane packing: 8 rows for 32-bit, 16 for bf16/f16, 32 for 8-bit.
    row_granule = 8 * max(1, 4 // itemsize)
    granule_elems = row_granule * LANES

    total = x.size
    x_flat = jnp.ravel(x)
    padded = _round_up(total, granule_elems)
    if padded != total:
        # Ragged (size % 128 != 0) case -- rare for NN tensors.  Pad once inside
        # this same jit so the whole op stays a single kernel dispatch (no
        # prefix slice / separate XLA sin / concatenate).  The pad and the final
        # slice each cost one streaming pass; a masked 1-D kernel would avoid
        # them but pays 1-sublane-per-vreg compute layout on TPU.
        x_flat = jnp.pad(x_flat, (0, padded - total))

    rows = padded // LANES
    tile_rows = _pick_tile_rows(rows, row_granule, LANES * itemsize)
    y_flat = _sin_2d(x_flat.reshape(rows, LANES), tile_rows).reshape(-1)

    if padded != total:
        y_flat = y_flat[:total]
    return y_flat.reshape(orig_shape)


if __name__ == "__main__":
    key = jax.random.PRNGKey(0)
    # Small NCHW-like input consistent with a generic elementwise forward.
    x = jax.random.normal(key, (2, 4, 16, 16), dtype=jnp.float32)

    y = sin_pallas(x)
    jax.block_until_ready(y)
    ref = jnp.sin(x)
    assert y.shape == ref.shape and y.dtype == ref.dtype
    assert jnp.allclose(y, ref, atol=1e-6, rtol=1e-6), "mismatch vs jnp.sin (aligned path)"

    # Also exercise the ragged (size % 128 != 0) single-dispatch path.
    x_ragged = jax.random.normal(jax.random.PRNGKey(1), (7, 45), dtype=jnp.float32)
    y_ragged = sin_pallas(x_ragged)
    jax.block_until_ready(y_ragged)
    assert jnp.allclose(y_ragged, jnp.sin(x_ragged), atol=1e-6, rtol=1e-6), \
        "mismatch vs jnp.sin (ragged path)"

    print("KERNEL_OK")
</pallas_src>

<mosaic_0001>
module attributes {stable_mosaic.version = 11 : i64} {
  func.func @_sin_kernel(%arg0: i32, %arg1: memref<8x128xf32, #tpu.memory_space<vmem>>, %arg2: memref<8x128xf32, #tpu.memory_space<vmem>>) attributes {dimension_semantics = [#tpu.dimension_semantics<parallel>], iteration_bounds = array<i64: 2>, scalar_prefetch = 0 : i64, scratch_operands = 0 : i64, tpu.core_type = #tpu.core_type<tc>, window_params = [{transform_indices = @transform_0, window_bounds = array<i64: 8, 128>}, {transform_indices = @transform_1, window_bounds = array<i64: 8, 128>}]} {
    %c0 = arith.constant 0 : index
    %c0_0 = arith.constant 0 : index
    %0 = vector.load %arg1[%c0, %c0_0] : memref<8x128xf32, #tpu.memory_space<vmem>>, vector<8x128xf32>
    %1 = math.sin %0 : vector<8x128xf32>
    %c0_1 = arith.constant 0 : index
    %c0_2 = arith.constant 0 : index
    %2 = vector.load %arg2[%c0_1, %c0_2] : memref<8x128xf32, #tpu.memory_space<vmem>>, vector<8x128xf32>
    tpu.vector_store %arg2[%c0_1, %c0_2], %1 {strides = array<i32>} : memref<8x128xf32, #tpu.memory_space<vmem>>, vector<8x128xf32>,
    return
  }
  func.func @transform_0(%arg0: i32) -> (i32, i32) {
    %c0_i32 = arith.constant 0 : i32
    %c0_i32_0 = arith.constant 0 : i32
    return %arg0, %c0_i32 : i32, i32
  }
  func.func @transform_1(%arg0: i32) -> (i32, i32) {
    %c0_i32 = arith.constant 0 : i32
    %c0_i32_0 = arith.constant 0 : i32
    return %arg0, %c0_i32 : i32, i32
  }
}

</mosaic_0001>

<llo_original>
// kernel: sin_pallas.1
$region0: #{sin_pallas.1}
  #allocation0 [shape = 'u32[]', space=smem, size = 0x4, offset = 0x4, fixed_abs, tag = 'smem constant byte address 0x4 - core index']
  #allocation1 [shape = 'u32[144,128]{1,0:T(1,128)}', space=vmem, size = 0x12000, scoped, tag = 'internal scratch']
  %s0 = inlined_call_operand.vmem [shape: f32[16,128], index: 0, kind: input, shape index: {}]
  %s1 = inlined_call_operand.vmem [shape: f32[16,128], index: 1, kind: output, shape index: {}]
  %s2 = sld [smem:[#allocation0]]
  $region37: #{sin_pallas.1} parent=0
    _
  %s4 = ssub.s32 1, %s2
  %s5 = scalar_select 0, %s4, %s2
  loop: start=0, step=1, limit=4
  $region2: #{sin_pallas.1} parent=0 // loop_pre_header
    _
  $region3: #{sin_pallas.1} parent=0 // loop_header
    %s7 = sphi 0, %s11
    %p8 = scmp.ge.s32.totalorder %s7, 4
    %s17 = sphi 0, %s19
    %s20 = sphi 0, %s17
    %s21 = sphi 0, %s20
    %s37 = sphi 0, %s21
    %s43 = sphi 0, %s45
    %s46 = sphi 0, %s43
    %s47 = sphi 0, %s46
    %s63 = sphi 0, %s47
  $region4: #{sin_pallas.1} parent=0 // loop_header_branch
    %10 = sbr.rel (%p8) target = $region8
  $region5: #{sin_pallas.1} parent=0 // loop_body
    %s12 = ssub.s32 %s7, 1
    %s13 = ssub.s32 %s7, 2
    %s14 = sadd.s32 %s7, 1
    %s15 = ssub.s32 %s7, %s14
    %p16 = scmp.eq.s32.totalorder %s15, 0
    %s18 = sadd.s32 %s17, 1
    %s19 = scalar_select %p16, %s17, %s18
    %p22 = pneg %p16
    %p23 = scmp.eq.s32.totalorder %s7, 1
    %p24 = por %p22, %p23
    %p25 = scmp.ne.s32.totalorder %s17, %s20
    %p26 = scmp.eq.s32.totalorder %s7, 0
    %p27 = por %p25, %p26
    %p28 = scmp.ne.s32.totalorder %s17, %s20
    %p29 = scmp.eq.s32.totalorder %s12, 1
    %p30 = por %p28, %p29
    %p31 = scmp.ne.s32.totalorder %s20, %s21
    %p32 = scmp.eq.s32.totalorder %s12, 0
    %p33 = por %p31, %p32
    %p34 = scmp.ne.s32.totalorder %s20, %s21
    %p35 = scmp.eq.s32.totalorder %s13, 1
    %p36 = por %p34, %p35
    %p38 = scmp.ne.s32.totalorder %s21, %s37
    %p39 = scmp.eq.s32.totalorder %s13, 0
    %p40 = por %p38, %p39
    %s41 = ssub.s32 %s7, %s14
    %p42 = scmp.eq.s32.totalorder %s41, 0
    %s44 = sadd.s32 %s43, 1
    %s45 = scalar_select %p42, %s43, %s44
    %p48 = pneg %p42
    %p49 = scmp.eq.s32.totalorder %s7, 1
    %p50 = por %p48, %p49
    %p51 = scmp.ne.s32.totalorder %s43, %s46
    %p52 = scmp.eq.s32.totalorder %s7, 0
    %p53 = por %p51, %p52
    %p54 = scmp.ne.s32.totalorder %s43, %s46
    %p55 = scmp.eq.s32.totalorder %s12, 1
    %p56 = por %p54, %p55
    %p57 = scmp.ne.s32.totalorder %s46, %s47
    %p58 = scmp.eq.s32.totalorder %s12, 0
    %p59 = por %p57, %p58
    %p60 = scmp.ne.s32.totalorder %s46, %s47
    %p61 = scmp.eq.s32.totalorder %s13, 1
    %p62 = por %p60, %p61
    %p64 = scmp.ne.s32.totalorder %s47, %s63
    %p65 = scmp.eq.s32.totalorder %s13, 0
    %p66 = por %p64, %p65
    %p67 = scmp.le.s32.totalorder 1, %s7
    %p68 = scmp.lt.s32.totalorder %s7, 3
    %p69 = pnand %p67, %p68
    %p70 = pneg %p69
    // Predicated region
    $region9: #{sin_pallas.1} parent=5 // pred_check
      _
    $region10: #{sin_pallas.1} parent=5 // pred_check_branch
      %72 = sbr.rel (%p69) target = $region12
    $region11: #{sin_pallas.1} parent=5 // pred_region
      %s73 = ssub.s32 %s7, 1
    $region12: #{sin_pallas.1} parent=5 // pred_fallthru
      _
    %p74 = scmp.lt.s32.totalorder %s7, 2
    // Predicated region
    $region13: #{sin_pallas.1} parent=5 // pred_check
      %p75 = pneg %p74
    $region14: #{sin_pallas.1} parent=5 // pred_check_branch
      %77 = sbr.rel (%p75) target = $region16
    $region15: #{sin_pallas.1} parent=5 // pred_region
      // Predicated region
      $region17: #{sin_pallas.1} parent=15 // pred_check
        %p78 = pneg %p27
      $region18: #{sin_pallas.1} parent=15 // pred_check_branch
        %80 = sbr.rel (%p78) target = $region20
      $region19: #{sin_pallas.1} parent=15 // pred_region
        %p81 = scmp.lt.s32.totalorder %s7, 1
        %s82 = scalar_select %p81, %s7, 1
        %s83 = smul.addr %s82, 8
        %s84 = scalar_lea.vmem %s0, %s83
      $region20: #{sin_pallas.1} parent=15 // pred_fallthru
        _
    $region16: #{sin_pallas.1} parent=5 // pred_fallthru
      _
    %p85 = scmp.le.s32.totalorder 1, %s7
    %p86 = scmp.lt.s32.totalorder %s7, 3
    %p87 = pnand %p85, %p86
    %p88 = pneg %p87
    // Predicated region
    $region21: #{sin_pallas.1} parent=5 // pred_check
      _
    $region22: #{sin_pallas.1} parent=5 // pred_check_branch
      %90 = sbr.rel (%p87) target = $region24
    $region23: #{sin_pallas.1} parent=5 // pred_region
      %s91 = ssub.s32 %s7, 1
      %p92 = scmp.lt.s32.totalorder %s12, 1
      %s93 = scalar_select %p92, %s12, 1
      %s94 = smul.addr %s93, 8
      %s95 = scalar_lea.vmem %s0, %s94
      %p96 = pneg %p33
      %p97 = pneg %p30
      %p98 = pneg %p59
      %p99 = pneg %p56
      %p100 = scmp.lt.s32.totalorder %s12, 1
      %s101 = scalar_select %p100, %s12, 1
      %s102 = smul.addr %s101, 8
      %s103 = scalar_lea.vmem %s1, %s102
      %p104 = scmp.lt.s32.totalorder %s12, 1
      %s105 = scalar_select %p104, %s12, 1
      %s106 = smul.addr %s105, 8
      %s107 = scalar_lea.vmem %s0, %s106
      %p108 = scmp.lt.s32.totalorder %s12, 1
      %s109 = scalar_select %p108, %s12, 1
      %s110 = smul.addr %s109, 8
      %s111 = scalar_lea.vmem %s1, %s110
      %v112 = vld [vmem:[%s107] sm:$0xff]
      %v113 = vand.u32 2147483647, %v112
      %vm114 = vcmp.le.f32.partialorder %v113, 0.7853982
      %vm115 = vcmp.lt.s32.totalorder %v112, 0
      %v116 = vand.u32 %v112, 2139095040
      %v117 = vshrl.u32 %v116, 23
      %v118 = vsub.s32 %v117, 127
      %v119 = vand.u32 2147483647, %v112
      %v120 = vand.u32 %v119, 8388607
      %v121 = vor.u32 %v120, 8388608
      %v122 = vsub.s32 0, %v121
      %v123 = vadd.s32 %v118, 1
      %vm124 = vcmp.gt.s32.totalorder %v123, 0
      %v125 = vsel %vm124, %v123, 0
      %v126 = vshrl.u32 %v125, 5
      %v127 = vand.u32 %v125, 31
      %v128 = vsub.s32 32, %v127
      %v129 = vshrl.u32 683565275, %v128
      %v130 = vshll.u32 683565275, %v127
      %v131 = vshrl.u32 2475754826, %v128
      %v132 = vor.u32 %v130, %v131
      %v133 = vshll.u32 2475754826, %v127
      %v134 = vshrl.u32 2131351028, %v128
      %v135 = vor.u32 %v133, %v134
      %v136 = vshll.u32 2131351028, %v127
      %v137 = vshrl.u32 2102212464, %v128
      %v138 = vor.u32 %v136, %v137
      %v139 = vshll.u32 2102212464, %v127
      %v140 = vshrl.u32 920167782, %v128
      %v141 = vor.u32 %v139, %v140
      %v142 = vshll.u32 920167782, %v127
      %v143 = vshrl.u32 1326507024, %v128
      %v144 = vor.u32 %v142, %v143
      %vm145 = vcmp.lt.s32.totalorder %v126, 1
      %vm146 = vcmp.lt.s32.totalorder %v126, 2
      %vm147 = vcmp.lt.s32.totalorder %v126, 3
      %vm148 = vcmp.lt.s32.totalorder %v126, 4
      %v149 = vsel %vm145, %v129, %v132
      %v150 = vsel %vm148, %v138, 2102212464
      %v151 = vsel %vm147, %v135, %v150
      %v152 = vsel %vm146, %v149, %v151
      %v153 = vsel %vm145, %v132, %v135
      %v154 = vsel %vm148, %v141, 920167782
      %v155 = vsel %vm147, %v138, %v154
      %v156 = vsel %vm146, %v153, %v155
      %v157 = vsel %vm145, %v135, %v138
      %v158 = vsel %vm148, %v144, 1326507024
      %v159 = vsel %vm147, %v141, %v158
      %v160 = vsel %vm146, %v157, %v159
      %v161 = vshll.u32 %v121, 8
      %v162 = vmul.u32.u64.compose %v161, %v160
      %v163 = vextract.low.u32 %v162
      %v164 = vextract.high.u32 %v162
      %v165 = vmul.u32.u64.compose %v161, %v156
      %v166 = vextract.low.u32 %v165
      %v167 = vextract.high.u32 %v165
      %v168 = vmul.u32 %v161, %v152
      %v169 = vadd.s32 %v164, %v166
      %vm170 = vc.u32 %v164, %v166
      %v171 = vadd.s32 %v167, 1
      %v172 = vsel %vm170, %v171, %v167
      %v173 = vadd.s32 %v168, %v172
      %v174 = vadd.s32 %v173, 536870912
      %v175 = vshrl.u32 %v174, 30
      %v176 = vshll.u32 %v175, 30
      %v177 = vsub.s32 %v173, %v176
      %vm178 = vcmp.lt.s32.totalorder %v177, 0
      %v179 = vsub.s32 0, %v177
      %v180 = vsel %vm178, %v179, %v177
      %v181 = vclz %v180
      %v182 = vsub.s32 %v181, 2
      %vm183 = vcmp.gt.s32.totalorder 0, %v182
      %v184 = vsel %vm183, 0, %v182
      %v185 = vsub.s32 32, %v184
      %v186 = vshll.u32 %v177, %v184
      %v187 = vshrl.u32 %v169, %v185
      %v188 = vor.u32 %v186, %v187
      %v189 = vsub.s32 4294967266, %v184
      %v190 = vadd.s32 %v189, 127
      %v191 = vshll.u32 %v190, 23
      %v192 = vor.u32 4788187, %v191
      %v193 = vand.u32 2147483647, %v192
      %v195 = vcvt.s32.f32 %v188
      %v196 = vmul.f32 %v195, %v193
      %v197 = vxor.u32 %v196, 2147483648
      %v198 = vsel %vm115, %v197, %v196
      %v199 = vsub.s32 4, %v175
      %v200 = vsel %vm115, %v199, %v175
      %v201 = vsel %vm114, %v112, %v198
      %v202 = vsel %vm114, 0, %v200
      %v203 = vcosq.f32.pop %v201
      %v204 = vsinq.f32.pop %v201
      %vm205 = vweird.f32 %v112
      %v206 = vadd.s32 %v202, 3
      %v207 = vand.u32 %v206, 3
      %vm208 = vcmp.lt.s32.totalorder %v207, 2
      %vm209 = vcmp.eq.s32.totalorder %v207, 0
      %v210 = vxor.u32 %v204, 2147483648
      %v211 = vsel %vm209, %v203, %v210
      %vm212 = vcmp.eq.s32.totalorder %v207, 2
      %v213 = vxor.u32 %v203, 2147483648
      %v214 = vsel %vm212, %v213, %v204
      %v215 = vsel %vm208, %v211, %v214
      %v216 = vsel %vm205, nan, %v215
      %217 = vst [vmem:[%s111] sm:$0xff] %v216
      %p218 = scmp.lt.s32.totalorder %s12, 1
      %s219 = scalar_select %p218, %s12, 1
      %s220 = smul.addr %s219, 8
      %s221 = scalar_lea.vmem %s1, %s220
      // Predicated region
      $region25: #{sin_pallas.1} parent=23 // pred_check
        %p222 = pneg %p56
      $region26: #{sin_pallas.1} parent=23 // pred_check_branch
        %224 = sbr.rel (%p222) target = $region28
      $region27: #{sin_pallas.1} parent=23 // pred_region
        _
      $region28: #{sin_pallas.1} parent=23 // pred_fallthru
        _
    $region24: #{sin_pallas.1} parent=5 // pred_fallthru
      _
    %p225 = scmp.le.s32.totalorder 2, %s7
    // Predicated region
    $region29: #{sin_pallas.1} parent=5 // pred_check
      %p226 = pneg %p225
    $region30: #{sin_pallas.1} parent=5 // pred_check_branch
      %228 = sbr.rel (%p226) target = $region32
    $region31: #{sin_pallas.1} parent=5 // pred_region
      %s229 = ssub.s32 %s7, 2
      // Predicated region
      $region33: #{sin_pallas.1} parent=31 // pred_check
        %p230 = pneg %p62
      $region34: #{sin_pallas.1} parent=31 // pred_check_branch
        %232 = sbr.rel (%p230) target = $region36
      $region35: #{sin_pallas.1} parent=31 // pred_region
        %p233 = scmp.lt.s32.totalorder %s13, 1
        %s234 = scalar_select %p233, %s13, 1
        %s235 = smul.addr %s234, 8
        %s236 = scalar_lea.vmem %s1, %s235
      $region36: #{sin_pallas.1} parent=31 // pred_fallthru
        _
    $region32: #{sin_pallas.1} parent=5 // pred_fallthru
      _
  $region6: #{sin_pallas.1} parent=0 // loop_footer
    %s11 = sadd.s32 1, %s7
  $region7: #{sin_pallas.1} parent=0 // loop_footer_branch
    %6 = sbr.rel target = $region3
  $region8: #{sin_pallas.1} parent=0 // loop_exit
    _

</llo_original>
